<compile_context>
chip_gen: v7x
topology: tpu7x:2x2x1
jax: 0.10.0
libtpu: 0.0.40
codegen_flags: <defaults>
</compile_context>

<pallas_src>
import jax
import jax.numpy as jnp
from jax.experimental import pallas as pl
from jax.experimental.pallas import tpu as pltpu


# ---------------------------------------------------------------------------
# Kernels
# ---------------------------------------------------------------------------
def _simple_kernel(scale_ref, s_ref, z_ref, zp_ref, o_ref):
    """Whole feature row in one tile: reduce along lanes and store directly."""
    inv_sigma2 = scale_ref[0, 0]
    s = s_ref[...].astype(jnp.float32)
    zd = (z_ref[...] - zp_ref[...]).astype(jnp.float32)   # bf16 sub, then upcast
    diff = s - zd * inv_sigma2
    o_ref[...] = jnp.sum(diff * diff, axis=1, keepdims=True)


def _make_staged_kernel(block_d):
    """Feature axis is tiled: accumulate a lane-wide (block_b, 128) partial in
    VMEM scratch (VPU adds only); do the single 128->1 XLU reduce + the narrow
    (block_b, 1) store only at the last D step."""
    n_chunks = block_d // 128

    def kernel(scale_ref, s_ref, z_ref, zp_ref, o_ref, acc_ref):
        d = pl.program_id(1)

        @pl.when(d == 0)
        def _():
            acc_ref[...] = jnp.zeros_like(acc_ref)

        inv_sigma2 = scale_ref[0, 0]
        s = s_ref[...].astype(jnp.float32)
        zd = (z_ref[...] - zp_ref[...]).astype(jnp.float32)
        diff = s - zd * inv_sigma2
        sq = diff * diff

        partial = acc_ref[...]
        for c in range(n_chunks):          # static unroll, vreg-aligned slices
            partial = partial + sq[:, c * 128:(c + 1) * 128]
        acc_ref[...] = partial

        @pl.when(d == pl.num_programs(1) - 1)
        def _():
            o_ref[...] = jnp.sum(acc_ref[...], axis=1, keepdims=True)

    return kernel


# ---------------------------------------------------------------------------
# Trace-time heuristics
# ---------------------------------------------------------------------------
def _tpu_target_info():
    """Best-effort (vmem_capacity_bytes, tensorcores_per_device)."""
    vmem_cap = 64 * 1024 * 1024            # conservative default (v7x per-TC)
    try:
        vmem_cap = int(pltpu.get_tpu_info().vmem_capacity_bytes)
    except Exception:
        pass
    # Wrongly splitting on a 1-TC part costs ~0.35us; wrongly NOT splitting on a
    # 2-TC part costs 2x bandwidth -> default to 2 when detection fails.
    n_tc = 2
    try:
        kind = jax.devices()[0].device_kind.lower()
        if any(tag in kind for tag in ("v2", "v3", "lite", "v5e", "v6e", "v6")):
            n_tc = 1                       # single-TensorCore parts
        else:
            n_tc = 2                       # v4/v5p megacore, v7x dual-TC
    except Exception:
        pass
    return vmem_cap, n_tc


def _pick_block_d(D, max_block_d=1024):
    """Largest lane tile that is a multiple of 128 and evenly divides D."""
    if D <= max_block_d:
        return D
    if D % 128 != 0:
        return D                           # cannot tile the lane axis cleanly
    cand = (max_block_d // 128) * 128
    while cand >= 128:
        if D % cand == 0:
            return cand
        cand -= 128
    return D


def _pick_block_b(B, block_d, stream_itemsize_sum, n_buffers, align, n_cores,
                  vmem_cap):
    """Batch tile from the VMEM budget + a TensorCore-balance cost model."""
    if B <= align:
        return B

    if vmem_cap <= (64 << 20):             # v7x-class: 64 MiB VMEM per TC
        budget, hard_cap = 44 << 20, 512
    else:                                  # v5e / v6e: 128 MiB
        budget, hard_cap = 80 << 20, 1024

    # n_buffers pipelined copies of the 3 input streams + ~4 tile-sized f32
    # elementwise temporaries (upcasts / diff / diff^2).
    per_row = n_buffers * block_d * stream_itemsize_sum + 4 * block_d * 4
    cap = max(align, min(hard_cap, (budget // per_row) // align * align))

    if n_cores <= 1 and B <= cap:
        return B                           # single-TC: one big tile, no split

    # Per-grid-step overhead (~0.35us) expressed in equivalent rows of HBM read
    # traffic at ~1 TB/s per core.
    row_bytes = max(1, block_d * stream_itemsize_sum)
    overhead_rows = max(1, int(0.35e-6 * 1.0e12) // row_bytes)

    candidates = set(range(align, min(cap, B) + 1, align))
    if B <= cap:
        candidates.add(B)                  # full-dim block is always legal

    best_bb, best_cost = None, None
    for bb in sorted(candidates, reverse=True):        # ties -> larger tile
        n_b = -(-B // bb)
        busy_blocks = -(-n_b // max(1, n_cores))       # blocks on busiest core
        cost = busy_blocks * (bb + overhead_rows)
        if best_cost is None or cost < best_cost:
            best_bb, best_cost = bb, cost
    return best_bb


# ---------------------------------------------------------------------------
# Public wrapper
# ---------------------------------------------------------------------------
def score_matching_loss(s_theta, z, z_prime, sigma, *, block_b=None,
                        block_d=None, input_buffer_count=None):
    """Per-sample score-matching loss, shape (B,), matching the PyTorch module.

    HBM-read bound (~12 B/elem at f32, ~5 flops/elem): pass bf16 inputs when
    the caller can afford it — it halves wall time on every TPU generation;
    accumulation is always f32.
    """
    B, D = s_theta.shape
    assert z.shape == (B, D) and z_prime.shape == (B, D)

    vmem_cap, n_cores = _tpu_target_info()

    itemsizes = [jnp.dtype(x.dtype).itemsize for x in (s_theta, z, z_prime)]
    stream_itemsize_sum = sum(itemsizes)
    align = {4: 8, 2: 16, 1: 32}.get(min(itemsizes), 8)   # sublane packing rule

    # Input pipelining depth (2 = standard double-buffer).  3 may be swept on
    # 128-MiB parts if a profile shows exposed DMA; never on v7x's 64 MiB.
    n_buffers = 2 if input_buffer_count is None else int(input_buffer_count)

    if block_d is None:
        block_d = _pick_block_d(D)
    else:
        block_d = min(int(block_d), D)
    if block_d != D:
        assert block_d % 128 == 0 and D % block_d == 0, (
            "block_d must evenly tile D in multiples of 128")

    if block_b is None:
        block_b = _pick_block_b(B, block_d, stream_itemsize_sum, n_buffers,
                                align, n_cores, vmem_cap)
    else:
        block_b = min(int(block_b), B)
        if block_b != B:
            block_b = max(align, (block_b // align) * align)

    n_b = pl.cdiv(B, block_b)
    n_d = pl.cdiv(D, block_d)

    # VMEM accounting: pipelined inputs + ~4 tile-sized f32 temporaries +
    # scratch/output, plus 50% headroom (floor 32 MiB so v5e's 16-MiB scoped
    # default never binds), capped at the physical capacity.
    est_vmem = (n_buffers * block_b * block_d * stream_itemsize_sum
                + 4 * block_b * block_d * 4
                + block_b * 128 * 4 + 2 * block_b * 4)
    vmem_limit = int(min(vmem_cap, max(32 << 20, int(est_vmem * 1.5) + (2 << 20))))

    # Scalar parameter via SMEM so a traced sigma also works.  Multiplying by a
    # precomputed 1/sigma^2 differs from dividing by sigma^2 only at ulp level;
    # a per-element divide would serialize on the single EUP and not be hidden.
    inv_sigma2 = (1.0 / (jnp.asarray(sigma, jnp.float32) ** 2)).reshape(1, 1)

    blk_kwargs = {}
    if n_buffers != 2:
        blk_kwargs["pipeline_mode"] = pl.Buffered(n_buffers)

    if n_d == 1:
        kernel = _simple_kernel
        grid = (n_b,)
        in_specs = [
            pl.BlockSpec(memory_space=pltpu.MemorySpace.SMEM),
            pl.BlockSpec((block_b, block_d), lambda i: (i, 0), **blk_kwargs),
            pl.BlockSpec((block_b, block_d), lambda i: (i, 0), **blk_kwargs),
            pl.BlockSpec((block_b, block_d), lambda i: (i, 0), **blk_kwargs),
        ]
        out_specs = pl.BlockSpec((block_b, 1), lambda i: (i, 0))
        scratch_shapes = ()
        dim_sem = ("parallel",)
    else:
        kernel = _make_staged_kernel(block_d)
        grid = (n_b, n_d)
        in_specs = [
            pl.BlockSpec(memory_space=pltpu.MemorySpace.SMEM),
            pl.BlockSpec((block_b, block_d), lambda i, d: (i, d), **blk_kwargs),
            pl.BlockSpec((block_b, block_d), lambda i, d: (i, d), **blk_kwargs),
            pl.BlockSpec((block_b, block_d), lambda i, d: (i, d), **blk_kwargs),
        ]
        out_specs = pl.BlockSpec((block_b, 1), lambda i, d: (i, 0))
        scratch_shapes = (pltpu.VMEM((block_b, 128), jnp.float32),)
        dim_sem = ("parallel", "arbitrary")

    out = pl.pallas_call(
        kernel,
        out_shape=jax.ShapeDtypeStruct((B, 1), jnp.float32),
        grid_spec=pltpu.PrefetchScalarGridSpec(
            num_scalar_prefetch=0,
            grid=grid,
            in_specs=in_specs,
            out_specs=out_specs,
            scratch_shapes=scratch_shapes,
        ),
        compiler_params=pltpu.CompilerParams(
            dimension_semantics=dim_sem,
            vmem_limit_bytes=vmem_limit,
        ),
    )(inv_sigma2, s_theta, z, z_prime)
    return out[:, 0]


def _reference(s_theta, z, z_prime, sigma):
    target = (z.astype(jnp.float32) - z_prime.astype(jnp.float32)) / sigma ** 2
    return jnp.sum((s_theta.astype(jnp.float32) - target) ** 2, axis=1)


if __name__ == "__main__":
    sigma = 0.5
    key = jax.random.PRNGKey(0)
    ks = jax.random.split(key, 9)

    # --- Case 1: small single-tile problem, auto tile selection -------------
    B, D = 8, 128
    s_theta = jax.random.normal(ks[0], (B, D), dtype=jnp.float32)
    z = jax.random.normal(ks[1], (B, D), dtype=jnp.float32)
    z_prime = jax.random.normal(ks[2], (B, D), dtype=jnp.float32)

    loss = jax.block_until_ready(score_matching_loss(s_theta, z, z_prime, sigma))
    ref = _reference(s_theta, z, z_prime, sigma)
    assert loss.shape == (B,)
    assert jnp.allclose(loss, ref, rtol=1e-5, atol=1e-5)

    # Host-side glue matching the module's _print calls.
    target = (z - z_prime) / sigma ** 2
    print(f"target norm: {float(jnp.mean(jnp.linalg.norm(target, axis=1))):4f}")
    print(f"pred norm: {float(jnp.mean(jnp.linalg.norm(s_theta, axis=1))):4f}")
    print(f"loss: {float(jnp.mean(loss)):4f}")

    # --- Case 2: D-axis accumulator grid + partial (non-divisible) batch tile
    B2, D2 = 24, 512
    s2 = jax.random.normal(ks[3], (B2, D2), dtype=jnp.float32)
    z2 = jax.random.normal(ks[4], (B2, D2), dtype=jnp.float32)
    zp2 = jax.random.normal(ks[5], (B2, D2), dtype=jnp.float32)
    loss2 = jax.block_until_ready(
        score_matching_loss(s2, z2, zp2, sigma, block_b=16, block_d=128))
    assert jnp.allclose(loss2, _reference(s2, z2, zp2, sigma), rtol=1e-5, atol=1e-3)

    # --- Case 3: auto tiling with B not a multiple of 8 ----------------------
    B3, D3 = 20, 256
    s3 = jax.random.normal(ks[6], (B3, D3), dtype=jnp.float32)
    z3 = jax.random.normal(ks[7], (B3, D3), dtype=jnp.float32)
    zp3 = jax.random.normal(ks[8], (B3, D3), dtype=jnp.float32)
    loss3 = jax.block_until_ready(score_matching_loss(s3, z3, zp3, sigma))
    assert jnp.allclose(loss3, _reference(s3, z3, zp3, sigma), rtol=1e-5, atol=1e-3)

    # --- Case 4: bf16 inputs (half the HBM read traffic), f32 accumulation ---
    s4 = s2[:16].astype(jnp.bfloat16)
    z4 = z2[:16].astype(jnp.bfloat16)
    zp4 = zp2[:16].astype(jnp.bfloat16)
    loss4 = jax.block_until_ready(score_matching_loss(s4, z4, zp4, sigma))
    assert jnp.allclose(loss4, _reference(s4, z4, zp4, sigma), rtol=2e-2, atol=2e-2)

    print("KERNEL_OK")
</pallas_src>

<mosaic_0001>
module attributes {stable_mosaic.version = 11 : i64} {
  func.func @_simple_kernel(%arg0: i32, %arg1: memref<1x1xf32, #tpu.memory_space<smem>>, %arg2: memref<8x128xf32, #tpu.memory_space<vmem>>, %arg3: memref<8x128xf32, #tpu.memory_space<vmem>>, %arg4: memref<8x128xf32, #tpu.memory_space<vmem>>, %arg5: memref<8x1xf32, #tpu.memory_space<vmem>>) attributes {dimension_semantics = [#tpu.dimension_semantics<parallel>], iteration_bounds = array<i64: 1>, scalar_prefetch = 0 : i64, scratch_operands = 0 : i64, tpu.core_type = #tpu.core_type<tc>, window_params = [{transform_indices = @transform_0, window_bounds = array<i64: 1, 1>}, {transform_indices = @transform_1, window_bounds = array<i64: 8, 128>}, {transform_indices = @transform_2, window_bounds = array<i64: 8, 128>}, {transform_indices = @transform_3, window_bounds = array<i64: 8, 128>}, {transform_indices = @transform_4, window_bounds = array<i64: 8, 1>}]} {
    %c0 = arith.constant 0 : index
    %c0_0 = arith.constant 0 : index
    %0 = memref.load %arg1[%c0, %c0_0] : memref<1x1xf32, #tpu.memory_space<smem>>
    %c0_1 = arith.constant 0 : index
    %c0_2 = arith.constant 0 : index
    %1 = vector.load %arg2[%c0_1, %c0_2] : memref<8x128xf32, #tpu.memory_space<vmem>>, vector<8x128xf32>
    %c0_3 = arith.constant 0 : index
    %c0_4 = arith.constant 0 : index
    %2 = vector.load %arg3[%c0_3, %c0_4] : memref<8x128xf32, #tpu.memory_space<vmem>>, vector<8x128xf32>
    %c0_5 = arith.constant 0 : index
    %c0_6 = arith.constant 0 : index
    %3 = vector.load %arg4[%c0_5, %c0_6] : memref<8x128xf32, #tpu.memory_space<vmem>>, vector<8x128xf32>
    %4 = arith.subf %2, %3 : vector<8x128xf32>
    %5 = vector.broadcast %0 : f32 to vector<8x128xf32>
    %6 = arith.mulf %4, %5 : vector<8x128xf32>
    %7 = arith.subf %1, %6 : vector<8x128xf32>
    %8 = arith.mulf %7, %7 : vector<8x128xf32>
    %cst = arith.constant dense<0.000000e+00> : vector<8xf32>
    %9 = vector.multi_reduction <add>, %8, %cst [1] : vector<8x128xf32> to vector<8xf32>
    %10 = vector.shape_cast %9 : vector<8xf32> to vector<8x1xf32>
    %c0_7 = arith.constant 0 : index
    %c0_8 = arith.constant 0 : index
    %11 = vector.load %arg5[%c0_7, %c0_8] : memref<8x1xf32, #tpu.memory_space<vmem>>, vector<8x1xf32>
    tpu.vector_store %arg5[%c0_7, %c0_8], %10 {strides = array<i32>} : memref<8x1xf32, #tpu.memory_space<vmem>>, vector<8x1xf32>,
    return
  }
  func.func @transform_0(%arg0: i32) -> (i32, i32) {
    %c0_i32 = arith.constant 0 : i32
    %c0_i32_0 = arith.constant 0 : i32
    %c0_i32_1 = arith.constant 0 : i32
    return %c0_i32, %c0_i32_0 : i32, i32
  }
  func.func @transform_1(%arg0: i32) -> (i32, i32) {
    %c0_i32 = arith.constant 0 : i32
    %c0_i32_0 = arith.constant 0 : i32
    return %arg0, %c0_i32 : i32, i32
  }
  func.func @transform_2(%arg0: i32) -> (i32, i32) {
    %c0_i32 = arith.constant 0 : i32
    %c0_i32_0 = arith.constant 0 : i32
    return %arg0, %c0_i32 : i32, i32
  }
  func.func @transform_3(%arg0: i32) -> (i32, i32) {
    %c0_i32 = arith.constant 0 : i32
    %c0_i32_0 = arith.constant 0 : i32
    return %arg0, %c0_i32 : i32, i32
  }
  func.func @transform_4(%arg0: i32) -> (i32, i32) {
    %c0_i32 = arith.constant 0 : i32
    %c0_i32_0 = arith.constant 0 : i32
    return %arg0, %c0_i32 : i32, i32
  }
}

</mosaic_0001>

<llo_original>
// kernel: tpu_custom_call.1
$region0: #{tpu_custom_call.1}
  #allocation0 [shape = 'u32[]', space=smem, size = 0x4, offset = 0x4, fixed_abs, tag = 'smem constant byte address 0x4 - core index']
  #allocation1 [shape = 'u32[144,128]{1,0:T(1,128)}', space=vmem, size = 0x12000, scoped, tag = 'internal scratch']
  #allocation2 [shape = 'f32[1,1]{1,0:T(1,128)S(6)}', space=smem, size = 0x200, scoped, tag = 'scoped memory for tpu_custom_call.1']
  %s0 = inlined_call_operand.<no memory space> [shape: f32[1,1], index: 0, kind: input, shape index: {}]
  %s1 = inlined_call_operand.hbm [shape: f32[8,128], index: 1, kind: input, shape index: {}]
  %s2 = inlined_call_operand.hbm [shape: f32[8,128], index: 2, kind: input, shape index: {}]
  %s3 = inlined_call_operand.vmem [shape: f32[8,128], index: 3, kind: input, shape index: {}]
  %s4 = inlined_call_operand.vmem [shape: f32[8,1], index: 4, kind: output, shape index: {}]
  %s5 = sld [smem:[#allocation0]]
  $region34: #{tpu_custom_call.1} parent=0
    _
  %s7 = ssub.s32 1, %s5
  %s8 = scalar_select 0, %s7, %s5
  %9 = sst [smem:[#allocation2]] %s0
  $region1: #{tpu_custom_call.1} parent=0
    #allocation3 [shape = 'u8[4096]{0}', space=vmem, size = 0x1000, scoped, tag = 'input window, operand 1, single buffered']
    #allocation4 [shape = 's32[1]{0}', space=sflag, size = 0x4, scoped, tag = 'scoped memory for tpu_custom_call.1']
    #allocation5 [shape = 'u8[4096]{0}', space=vmem, size = 0x1000, scoped, tag = 'input window, operand 2, single buffered']
    #allocation6 [shape = 's32[1]{0}', space=sflag, size = 0x4, scoped, tag = 'scoped memory for tpu_custom_call.1']
    %10 = vsyncpa [#allocation4], 0
    %11 = vsyncpa [#allocation6], 0
    // Predicated region
    $region2: #{tpu_custom_call.1} parent=1 // pred_check
      _
    $region3: #{tpu_custom_call.1} parent=1 // pred_check_branch
      %13 = sbr.rel (0) target = $region5
    $region4: #{tpu_custom_call.1} parent=1 // pred_region
      _
    $region5: #{tpu_custom_call.1} parent=1 // pred_fallthru
      _
    // Predicated region
    $region6: #{tpu_custom_call.1} parent=1 // pred_check
      _
    $region7: #{tpu_custom_call.1} parent=1 // pred_check_branch
      %15 = sbr.rel (0) target = $region9
    $region8: #{tpu_custom_call.1} parent=1 // pred_region
      %s17 = ssub.s32 128, 128
      %18 = vsyncadd [#allocation4], %s17
      %s20 = sshll.u32 [#allocation3], 4
      %s21 = int_to_ptr.vmem [resolvable:$true] %s20
      %23 = dma.hbm_to_vmem [thread:$0]  %s1, 128, %s21, [#allocation4]
    $region9: #{tpu_custom_call.1} parent=1 // pred_fallthru
      _
    // Predicated region
    $region10: #{tpu_custom_call.1} parent=1 // pred_check
      _
    $region11: #{tpu_custom_call.1} parent=1 // pred_check_branch
      %25 = sbr.rel (0) target = $region13
    $region12: #{tpu_custom_call.1} parent=1 // pred_region
      %s27 = ssub.s32 128, 128
      %28 = vsyncadd [#allocation6], %s27
      %s30 = sshll.u32 [#allocation5], 4
      %s31 = int_to_ptr.vmem [resolvable:$true] %s30
      %33 = dma.hbm_to_vmem [thread:$0]  %s2, 128, %s31, [#allocation6]
    $region13: #{tpu_custom_call.1} parent=1 // pred_fallthru
      _
    // Predicated region
    $region14: #{tpu_custom_call.1} parent=1 // pred_check
      _
    $region15: #{tpu_custom_call.1} parent=1 // pred_check_branch
      %35 = sbr.rel (0) target = $region17
    $region16: #{tpu_custom_call.1} parent=1 // pred_region
      _
    $region17: #{tpu_custom_call.1} parent=1 // pred_fallthru
      _
    // Predicated region
    $region18: #{tpu_custom_call.1} parent=1 // pred_check
      _
    $region19: #{tpu_custom_call.1} parent=1 // pred_check_branch
      %37 = sbr.rel (0) target = $region21
    $region20: #{tpu_custom_call.1} parent=1 // pred_region
      %38 = dma.done [#allocation4], 128
    $region21: #{tpu_custom_call.1} parent=1 // pred_fallthru
      _
    // Predicated region
    $region22: #{tpu_custom_call.1} parent=1 // pred_check
      _
    $region23: #{tpu_custom_call.1} parent=1 // pred_check_branch
      %40 = sbr.rel (0) target = $region25
    $region24: #{tpu_custom_call.1} parent=1 // pred_region
      %41 = dma.done [#allocation6], 128
    $region25: #{tpu_custom_call.1} parent=1 // pred_fallthru
      _
    %s42 = sld [smem:[#allocation2]]
    %v43 = vld [vmem:[#allocation3] sm:$0xff]
    %v44 = vld [vmem:[#allocation5] sm:$0xff]
    %v45 = vld [vmem:[%s3] sm:$0xff]
    %v46 = vsub.f32 %v44, %v45
    %v47 = vstv %s42
    %v48 = vmul.f32 %v46, %v47
    %v49 = vsub.f32 %v43, %v48
    %v50 = vmul.f32 %v49, %v49
    %51 = vadd.xlane.f32.xlu0 %v50
    %v52 = vpop.xlane.xlu0 %51
    %vm53 = vcmask 7168
    %54 = vst.msk [vmem:[%s4] sm:$0xff] %vm53, %v52
    // Predicated region
    $region26: #{tpu_custom_call.1} parent=1 // pred_check
      _
    $region27: #{tpu_custom_call.1} parent=1 // pred_check_branch
      %56 = sbr.rel (0) target = $region29
    $region28: #{tpu_custom_call.1} parent=1 // pred_region
      _
    $region29: #{tpu_custom_call.1} parent=1 // pred_fallthru
      _
    // Predicated region
    $region30: #{tpu_custom_call.1} parent=1 // pred_check
      _
    $region31: #{tpu_custom_call.1} parent=1 // pred_check_branch
      %58 = sbr.rel (0) target = $region33
    $region32: #{tpu_custom_call.1} parent=1 // pred_region
      _
    $region33: #{tpu_custom_call.1} parent=1 // pred_fallthru
      _
    %59 = vsyncpa [#allocation4], 1
    %60 = vsyncpa [#allocation6], 1

</llo_original>
